<compile_context>
chip_gen: v6e
topology: v6e:2x2x1
jax: 0.10.0
libtpu: 0.0.40
codegen_flags: <defaults>
</compile_context>

<pallas_src>
import functools

import jax
import jax.numpy as jnp
from jax.experimental import pallas as pl
from jax.experimental.pallas import tpu as pltpu


# --------------------------------------------------------------------------
# Kernel
# --------------------------------------------------------------------------
def _ce_kernel(logits_ref, tgt_ref, w_ref, loss_ref, wsum_ref, *, hw):
    """Per-block partial sums of w[y]*(-log p[y]) and w[y] over valid pixels.

    logits_ref: (1, C, T)  native dtype (cast to f32 in-kernel)
    tgt_ref:    (1, 1, T)  int8/int16/int32, ignore pixels already remapped to -1
    w_ref:      (C, 1)     f32 class weights
    loss_ref / wsum_ref: (1, 1, 1, 1) f32 partial outputs for this block
    """
    j = pl.program_id(1)

    logits = logits_ref[0].astype(jnp.float32)          # (C, T)
    tgt = tgt_ref[0].astype(jnp.int32)                   # (1, T)
    cw = w_ref[...].astype(jnp.float32)                  # (C, 1)

    C, T = logits.shape

    # Ragged-tail mask (global lane index < H*W) and ignore mask (tgt == -1).
    col = jax.lax.broadcasted_iota(jnp.int32, (1, T), 1) + j * T      # (1, T)
    valid = jnp.logical_and(col < hw, tgt >= 0)                        # (1, T)

    # Numerically-stable log-sum-exp over channels (sublane axis).
    m = jnp.max(logits, axis=0, keepdims=True)                         # (1, T)
    lse = jnp.log(jnp.sum(jnp.exp(logits - m), axis=0, keepdims=True)) + m

    # One-hot gather of target logit and its class weight: (C,1) iota is
    # broadcast inside the compare; selects replace convert+multiply.
    class_ids = jax.lax.broadcasted_iota(jnp.int32, (C, 1), 0)         # (C, 1)
    eq = class_ids == tgt                                              # (C, T)
    logit_t = jnp.sum(jnp.where(eq, logits, 0.0), axis=0, keepdims=True)   # (1, T)
    w_t = jnp.sum(jnp.where(eq, cw, 0.0), axis=0, keepdims=True)           # (1, T)

    nll = (lse - logit_t) * w_t                                        # (1, T)

    # jnp.where (select) blocks NaN/garbage from masked lanes.
    loss_p = jnp.sum(jnp.where(valid, nll, 0.0), axis=-1, keepdims=True)
    wsum_p = jnp.sum(jnp.where(valid, w_t, 0.0), axis=-1, keepdims=True)

    loss_ref[...] = loss_p.reshape(1, 1, 1, 1)
    wsum_ref[...] = wsum_p.reshape(1, 1, 1, 1)


# --------------------------------------------------------------------------
# Tiling / VMEM planning
# --------------------------------------------------------------------------
def _round_up(x, m):
    return ((x + m - 1) // m) * m


def _vmem_plan():
    """Generation-aware (working-set budget, vmem_limit_bytes)."""
    try:
        cap = int(pltpu.get_tpu_info().vmem_capacity_bytes)
    except Exception:  # pragma: no cover - conservative fallback
        cap = 64 * 1024 * 1024          # v7x per-TC VMEM (smallest generation)
    # Working set ~= half of physical VMEM, capped at 32 MiB; ask the compiler
    # for ~75% (capped 64 MiB) so block DMAs + compiler scratch have headroom.
    budget = min(cap // 2, 32 * 1024 * 1024)
    limit = min((cap * 3) // 4, 64 * 1024 * 1024)
    return budget, limit


def _pick_tile_hw(hw, c, logit_itemsize, tgt_itemsize, budget_bytes):
    """Largest 128-multiple lane tile whose full working set fits `budget`.

    Per-lane byte accounting:
      - logits block, double-buffered:            2 * C * itemsize
      - (1,1,T) target block, 8x sublane-padded:  2 * 8 * tgt_itemsize
      - ~(C,T) f32/bool body temporaries:         5 * C * 4
      - (1,T) f32 temps (m, lse, w_t, nll, ...),
        each padded to 8 sublanes:                ~10 * 8 * 4
    """
    per_lane = (2 * c * logit_itemsize
                + 2 * 8 * tgt_itemsize
                + 5 * c * 4
                + 10 * 8 * 4)
    t = budget_bytes // max(1, per_lane)
    t = (t // 128) * 128
    hw_pad = _round_up(hw, 128)
    if t >= hw_pad or hw <= 128:
        return hw                       # whole row fits: one full-extent block
    return max(128, t)                  # 128-multiple tile, ragged tail masked


# --------------------------------------------------------------------------
# Wrapper: nn.CrossEntropyLoss(weight, ignore_index, reduction='mean')
# --------------------------------------------------------------------------
def _weighted_ce_mean(logits_nchw, target_nhw, class_weights, ignore_index):
    N, C, H, W = logits_nchw.shape
    HW = H * W

    # Pure reshape of NCHW -- channels on sublane, pixels on lane, native dtype.
    logits = logits_nchw.reshape(N, C, HW)

    # Shrink the target stream: remap ignore_index -> -1 and ship the smallest
    # integer dtype that holds [-1, C-1].
    if C <= 127:
        tgt_dtype = jnp.int8
    elif C <= 32767:
        tgt_dtype = jnp.int16
    else:
        tgt_dtype = jnp.int32
    tgt_i = target_nhw.reshape(N, 1, HW).astype(jnp.int32)
    tgt_i = jnp.where(tgt_i == int(ignore_index), -1, tgt_i)
    tgt = tgt_i.astype(tgt_dtype)

    cw = jnp.asarray(class_weights, jnp.float32).reshape(C, 1)

    budget, vmem_limit = _vmem_plan()
    tile_hw = _pick_tile_hw(HW, C,
                            jnp.dtype(logits.dtype).itemsize,
                            jnp.dtype(tgt_dtype).itemsize,
                            budget)
    ghw = pl.cdiv(HW, tile_hw)

    loss_part, wsum_part = pl.pallas_call(
        functools.partial(_ce_kernel, hw=HW),
        out_shape=(
            jax.ShapeDtypeStruct((N, ghw, 1, 1), jnp.float32),
            jax.ShapeDtypeStruct((N, ghw, 1, 1), jnp.float32),
        ),
        grid=(N, ghw),
        in_specs=[
            pl.BlockSpec((1, C, tile_hw), lambda n, j: (n, 0, j)),
            pl.BlockSpec((1, 1, tile_hw), lambda n, j: (n, 0, j)),
            pl.BlockSpec((C, 1), lambda n, j: (0, 0)),
        ],
        out_specs=(
            pl.BlockSpec((1, 1, 1, 1), lambda n, j: (n, j, 0, 0)),
            pl.BlockSpec((1, 1, 1, 1), lambda n, j: (n, j, 0, 0)),
        ),
        compiler_params=pltpu.CompilerParams(
            dimension_semantics=("parallel", "parallel"),
            vmem_limit_bytes=int(vmem_limit)),
    )(logits, tgt, cw)

    # Tiny final reduction + divide in plain JAX (same 0/0 -> NaN behavior as
    # PyTorch when every pixel is ignore_index).
    return jnp.sum(loss_part) / jnp.sum(wsum_part)


def _scale_target(targets_n1hw, scaled_size):
    """F.interpolate(mode='nearest') on (N,1,Ht,Wt) float map -> (N,H,W) int.
    Pure index gather (glue), no compute worth a kernel."""
    # TODO(synk): PyTorch legacy 'nearest' (floor(i*scale)); verify parity if the
    # original used 'nearest-exact' / align_corners semantics.
    t = targets_n1hw.astype(jnp.float32)
    _, _, Ht, Wt = t.shape
    H, W = scaled_size
    hs = jnp.floor(jnp.arange(H, dtype=jnp.float32) * (Ht / H)).astype(jnp.int32)
    ws = jnp.floor(jnp.arange(W, dtype=jnp.float32) * (Wt / W)).astype(jnp.int32)
    hs = jnp.minimum(hs, Ht - 1)
    ws = jnp.minimum(ws, Wt - 1)
    out = t[:, 0, :, :][:, hs, :][:, :, ws]
    return out.astype(jnp.int32)  # .squeeze(1).long()


class FSCELoss:
    def __init__(self, class_weights, ignore_index):
        self.class_weights = jnp.asarray(class_weights, jnp.float32)
        self.ignore_index = int(ignore_index)

    def __call__(self, inputs, *targets, weights=None, **kwargs):
        if isinstance(inputs, (tuple, list)):
            if weights is None:
                weights = [1.0] * len(inputs)
            loss = 0.0
            for i in range(len(inputs)):
                tgt_src = targets[i] if len(targets) > 1 else targets[0]
                target = _scale_target(tgt_src, (inputs[i].shape[2], inputs[i].shape[3]))
                loss = loss + weights[i] * _weighted_ce_mean(
                    inputs[i], target, self.class_weights, self.ignore_index)
            return loss
        else:
            target = _scale_target(targets[0], (inputs.shape[2], inputs.shape[3]))
            return _weighted_ce_mean(inputs, target, self.class_weights, self.ignore_index)


# --------------------------------------------------------------------------
# Pure-JAX reference (correctness check only)
# --------------------------------------------------------------------------
def _ce_reference(logits_nchw, target_nhw, class_weights, ignore_index):
    N, C, H, W = logits_nchw.shape
    logits = jnp.transpose(logits_nchw, (0, 2, 3, 1)).reshape(-1, C).astype(jnp.float32)
    tgt = target_nhw.reshape(-1).astype(jnp.int32)
    logp = jax.nn.log_softmax(logits, axis=-1)
    safe_tgt = jnp.clip(tgt, 0, C - 1)
    nll = -jnp.take_along_axis(logp, safe_tgt[:, None], axis=-1)[:, 0]
    w = jnp.asarray(class_weights, jnp.float32)[safe_tgt]
    valid = (tgt != ignore_index).astype(jnp.float32)
    return jnp.sum(nll * w * valid) / jnp.sum(w * valid)


if __name__ == "__main__":
    key = jax.random.PRNGKey(0)
    k1, k2, k3 = jax.random.split(key, 3)

    N, C, H, W = 2, 4, 16, 16
    ignore_index = 255
    class_weights = [1.0, 2.0, 0.5, 1.5]

    # logits (NCHW) and a higher-resolution integer label map (N,1,32,32)
    logits = jax.random.normal(k1, (N, C, H, W), dtype=jnp.float32)
    labels = jax.random.randint(k2, (N, 1, 32, 32), 0, C).astype(jnp.float32)
    ignore_mask = jax.random.uniform(k3, (N, 1, 32, 32)) < 0.1
    labels = jnp.where(ignore_mask, float(ignore_index), labels)

    crit = FSCELoss(class_weights, ignore_index)
    loss = crit(logits, labels)
    loss = jax.block_until_ready(loss)

    # sanity check against pure-JAX reference
    target = _scale_target(labels, (H, W))
    ref = _ce_reference(logits, target, class_weights, ignore_index)
    assert jnp.allclose(loss, ref, rtol=1e-5, atol=1e-5), (loss, ref)

    # also exercise the multi-output (tuple) path with a ragged (non-128) H*W
    H2, W2 = 12, 13
    logits2 = jax.random.normal(k1, (N, C, H2, W2), dtype=jnp.float32)
    loss_multi = crit([logits, logits2], labels, weights=[1.0, 0.5])
    loss_multi = jax.block_until_ready(loss_multi)
    target2 = _scale_target(labels, (H2, W2))
    ref_multi = ref + 0.5 * _ce_reference(logits2, target2, class_weights, ignore_index)
    assert jnp.allclose(loss_multi, ref_multi, rtol=1e-5, atol=1e-5), (loss_multi, ref_multi)

    print("KERNEL_OK")
</pallas_src>

<mosaic_0001>
module attributes {stable_mosaic.version = 11 : i64} {
  func.func @_ce_kernel(%arg0: i32, %arg1: i32, %arg2: memref<1x4x256xf32, #tpu.memory_space<vmem>>, %arg3: memref<1x1x256xi8, #tpu.memory_space<vmem>>, %arg4: memref<4x1xf32, #tpu.memory_space<vmem>>, %arg5: memref<1x1x1x1xf32, #tpu.memory_space<vmem>>, %arg6: memref<1x1x1x1xf32, #tpu.memory_space<vmem>>) attributes {dimension_semantics = [#tpu.dimension_semantics<parallel>, #tpu.dimension_semantics<parallel>], iteration_bounds = array<i64: 2, 1>, scalar_prefetch = 0 : i64, scratch_operands = 0 : i64, tpu.core_type = #tpu.core_type<tc>, window_params = [{transform_indices = @transform_0, window_bounds = array<i64: 1, 4, 256>}, {transform_indices = @transform_1, window_bounds = array<i64: 1, 1, 256>}, {pipeline_mode = #tpu.pipeline_mode<synchronous>, transform_indices = @transform_2, window_bounds = array<i64: 4, 1>}, {transform_indices = @transform_3, window_bounds = array<i64: 1, 1, 1, 1>}, {transform_indices = @transform_4, window_bounds = array<i64: 1, 1, 1, 1>}]} {
    %c0 = arith.constant 0 : index
    %c0_0 = arith.constant 0 : index
    %c0_1 = arith.constant 0 : index
    %0 = vector.load %arg2[%c0, %c0_0, %c0_1] : memref<1x4x256xf32, #tpu.memory_space<vmem>>, vector<1x4x256xf32>
    %1 = vector.shape_cast %0 : vector<1x4x256xf32> to vector<4x256xf32>
    %c0_2 = arith.constant 0 : index
    %c0_3 = arith.constant 0 : index
    %c0_4 = arith.constant 0 : index
    %2 = vector.load %arg3[%c0_2, %c0_3, %c0_4] : memref<1x1x256xi8, #tpu.memory_space<vmem>>, vector<1x1x256xi8>
    %3 = vector.shape_cast %2 : vector<1x1x256xi8> to vector<1x256xi8>
    %4 = arith.extsi %3 : vector<1x256xi8> to vector<1x256xi32>
    %c0_5 = arith.constant 0 : index
    %c0_6 = arith.constant 0 : index
    %5 = vector.load %arg4[%c0_5, %c0_6] : memref<4x1xf32, #tpu.memory_space<vmem>>, vector<4x1xf32>
    %6 = tpu.iota {dimensions = array<i32: 1>} : vector<1x256xi32>
    %c256_i32 = arith.constant 256 : i32
    %7 = arith.muli %arg1, %c256_i32 : i32
    %8 = vector.broadcast %7 : i32 to vector<1x256xi32>
    %9 = arith.addi %6, %8 : vector<1x256xi32>
    %c256_i32_7 = arith.constant 256 : i32
    %10 = vector.broadcast %c256_i32_7 : i32 to vector<1x256xi32>
    %11 = arith.cmpi slt, %9, %10 : vector<1x256xi32>
    %c0_i32 = arith.constant 0 : i32
    %12 = vector.broadcast %c0_i32 : i32 to vector<1x256xi32>
    %13 = arith.cmpi sge, %4, %12 : vector<1x256xi32>
    %14 = arith.andi %11, %13 : vector<1x256xi1>
    %cst = arith.constant dense<0xFF800000> : vector<256xf32>
    %15 = vector.multi_reduction <maximumf>, %1, %cst [0] : vector<4x256xf32> to vector<256xf32>
    %16 = vector.shape_cast %15 : vector<256xf32> to vector<1x256xf32>
    %17 = vector.broadcast %16 : vector<1x256xf32> to vector<4x256xf32>
    %18 = arith.subf %1, %17 : vector<4x256xf32>
    %19 = math.exp %18 : vector<4x256xf32>
    %cst_8 = arith.constant dense<0.000000e+00> : vector<256xf32>
    %20 = vector.multi_reduction <add>, %19, %cst_8 [0] : vector<4x256xf32> to vector<256xf32>
    %21 = vector.shape_cast %20 : vector<256xf32> to vector<1x256xf32>
    %22 = math.log %21 : vector<1x256xf32>
    %23 = arith.addf %22, %16 : vector<1x256xf32>
    %24 = tpu.iota {dimensions = array<i32: 0>} : vector<4x1xi32>
    %25 = vector.broadcast %24 : vector<4x1xi32> to vector<4x256xi32>
    %26 = vector.broadcast %4 : vector<1x256xi32> to vector<4x256xi32>
    %27 = arith.cmpi eq, %25, %26 : vector<4x256xi32>
    %cst_9 = arith.constant 0.000000e+00 : f32
    %28 = vector.broadcast %cst_9 : f32 to vector<4x256xf32>
    %29 = arith.select %27, %1, %28 : vector<4x256xi1>, vector<4x256xf32>
    %cst_10 = arith.constant dense<0.000000e+00> : vector<256xf32>
    %30 = vector.multi_reduction <add>, %29, %cst_10 [0] : vector<4x256xf32> to vector<256xf32>
    %31 = vector.shape_cast %30 : vector<256xf32> to vector<1x256xf32>
    %cst_11 = arith.constant 0.000000e+00 : f32
    %32 = vector.shape_cast %5 : vector<4x1xf32> to vector<4x1xf32>
    %33 = vector.broadcast %32 : vector<4x1xf32> to vector<4x256xf32>
    %34 = vector.broadcast %cst_11 : f32 to vector<4x256xf32>
    %35 = arith.select %27, %33, %34 : vector<4x256xi1>, vector<4x256xf32>
    %cst_12 = arith.constant dense<0.000000e+00> : vector<256xf32>
    %36 = vector.multi_reduction <add>, %35, %cst_12 [0] : vector<4x256xf32> to vector<256xf32>
    %37 = vector.shape_cast %36 : vector<256xf32> to vector<1x256xf32>
    %38 = arith.subf %23, %31 : vector<1x256xf32>
    %39 = arith.mulf %38, %37 : vector<1x256xf32>
    %cst_13 = arith.constant 0.000000e+00 : f32
    %40 = vector.broadcast %cst_13 : f32 to vector<1x256xf32>
    %41 = arith.select %14, %39, %40 : vector<1x256xi1>, vector<1x256xf32>
    %cst_14 = arith.constant dense<0.000000e+00> : vector<1xf32>
    %42 = vector.multi_reduction <add>, %41, %cst_14 [1] : vector<1x256xf32> to vector<1xf32>
    %43 = vector.shape_cast %42 : vector<1xf32> to vector<1x1xf32>
    %cst_15 = arith.constant 0.000000e+00 : f32
    %44 = vector.broadcast %cst_15 : f32 to vector<1x256xf32>
    %45 = arith.select %14, %37, %44 : vector<1x256xi1>, vector<1x256xf32>
    %cst_16 = arith.constant dense<0.000000e+00> : vector<1xf32>
    %46 = vector.multi_reduction <add>, %45, %cst_16 [1] : vector<1x256xf32> to vector<1xf32>
    %47 = vector.shape_cast %46 : vector<1xf32> to vector<1x1xf32>
    %48 = vector.shape_cast %43 : vector<1x1xf32> to vector<1x1x1x1xf32>
    %c0_17 = arith.constant 0 : index
    %c0_18 = arith.constant 0 : index
    %c0_19 = arith.constant 0 : index
    %c0_20 = arith.constant 0 : index
    %49 = vector.load %arg5[%c0_17, %c0_18, %c0_19, %c0_20] : memref<1x1x1x1xf32, #tpu.memory_space<vmem>>, vector<1x1x1x1xf32>
    tpu.vector_store %arg5[%c0_17, %c0_18, %c0_19, %c0_20], %48 {strides = array<i32>} : memref<1x1x1x1xf32, #tpu.memory_space<vmem>>, vector<1x1x1x1xf32>,
    %50 = vector.shape_cast %47 : vector<1x1xf32> to vector<1x1x1x1xf32>
    %c0_21 = arith.constant 0 : index
    %c0_22 = arith.constant 0 : index
    %c0_23 = arith.constant 0 : index
    %c0_24 = arith.constant 0 : index
    %51 = vector.load %arg6[%c0_21, %c0_22, %c0_23, %c0_24] : memref<1x1x1x1xf32, #tpu.memory_space<vmem>>, vector<1x1x1x1xf32>
    tpu.vector_store %arg6[%c0_21, %c0_22, %c0_23, %c0_24], %50 {strides = array<i32>} : memref<1x1x1x1xf32, #tpu.memory_space<vmem>>, vector<1x1x1x1xf32>,
    return
  }
  func.func @transform_0(%arg0: i32, %arg1: i32) -> (i32, i32, i32) {
    %c0_i32 = arith.constant 0 : i32
    %c0_i32_0 = arith.constant 0 : i32
    return %arg0, %c0_i32, %arg1 : i32, i32, i32
  }
  func.func @transform_1(%arg0: i32, %arg1: i32) -> (i32, i32, i32) {
    %c0_i32 = arith.constant 0 : i32
    %c0_i32_0 = arith.constant 0 : i32
    return %arg0, %c0_i32, %arg1 : i32, i32, i32
  }
  func.func @transform_2(%arg0: i32, %arg1: i32) -> (i32, i32) {
    %c0_i32 = arith.constant 0 : i32
    %c0_i32_0 = arith.constant 0 : i32
    %c0_i32_1 = arith.constant 0 : i32
    return %c0_i32, %c0_i32_0 : i32, i32
  }
  func.func @transform_3(%arg0: i32, %arg1: i32) -> (i32, i32, i32, i32) {
    %c0_i32 = arith.constant 0 : i32
    %c0_i32_0 = arith.constant 0 : i32
    %c0_i32_1 = arith.constant 0 : i32
    return %arg0, %arg1, %c0_i32, %c0_i32_0 : i32, i32, i32, i32
  }
  func.func @transform_4(%arg0: i32, %arg1: i32) -> (i32, i32, i32, i32) {
    %c0_i32 = arith.constant 0 : i32
    %c0_i32_0 = arith.constant 0 : i32
    %c0_i32_1 = arith.constant 0 : i32
    return %arg0, %arg1, %c0_i32, %c0_i32_0 : i32, i32, i32, i32
  }
}

</mosaic_0001>

<llo_original>
// kernel: tpu_custom_call.1
$region0: #{tpu_custom_call.1}
  #allocation0 [shape = 'u32[]', space=smem, size = 0x4, offset = 0x4, fixed_abs, tag = 'smem constant byte address 0x4 - core index']
  #allocation1 [shape = 'u32[144,128]{1,0:T(1,128)}', space=vmem, size = 0x12000, scoped, tag = 'internal scratch']
  %s0 = inlined_call_operand.hbm [shape: f32[2,4,256], index: 0, kind: input, shape index: {}]
  %s1 = inlined_call_operand.vmem [shape: s8[2,1,256], index: 1, kind: input, shape index: {}]
  %s2 = inlined_call_operand.vmem [shape: f32[4,1], index: 2, kind: input, shape index: {}]
  %s3 = inlined_call_operand.vmem [shape: f32[2,1,1,1], index: 3, kind: output, shape index: {0}]
  %s4 = inlined_call_operand.vmem [shape: f32[2,1,1,1], index: 4, kind: output, shape index: {1}]
  %5 = xla_tuple %s3, %s4
  %s6 = sld [smem:[#allocation0]]
  $region57: #{tpu_custom_call.1} parent=0
    _
  %s8 = ssub.s32 1, %s6
  %s9 = scalar_select 0, %s8, %s6
  $region1: #{tpu_custom_call.1} parent=0
    #allocation2 [shape = 'u8[8192]{0}', space=vmem, size = 0x2000, scoped, tag = 'input window, operand 0']
    #allocation3 [shape = 's32[2]{0}', space=sflag, size = 0x8, scoped, tag = 'scoped memory for tpu_custom_call.1']
    %10 = vsyncpa [#allocation3], 0
    %s11 = scalar_lea.sflag [#allocation3], 1
    %12 = vsyncpa %s11, 0
    loop: start=0, step=1, limit=4
    $region2: #{tpu_custom_call.1} parent=1 // loop_pre_header
      _
    $region3: #{tpu_custom_call.1} parent=1 // loop_header
      %s14 = sphi 0, %s18
      %p15 = scmp.ge.s32.totalorder %s14, 4
      %s21 = sphi 0, %s33
      %s22 = sphi 0, %s29
      %s23 = sphi 0, %s21
      %s24 = sphi 0, %s22
      %s25 = sphi 0, %s23
      %s26 = sphi 0, %s24
      %s38 = sphi 0, %s40
      %s41 = sphi 0, %s38
      %s42 = sphi 0, %s41
      %s58 = sphi 0, %s42
      %s66 = sphi 0, %s68
      %s69 = sphi 0, %s66
      %s70 = sphi 0, %s69
      %s86 = sphi 0, %s70
      %s90 = sphi 0, %s90
      %s92 = sphi 0, %s90
      %s93 = sphi 0, %s92
      %s107 = sphi 0, %s93
      %s115 = sphi 0, %s117
      %s118 = sphi 0, %s115
      %s119 = sphi 0, %s118
      %s135 = sphi 0, %s119
      %s143 = sphi 0, %s145
      %s146 = sphi 0, %s143
      %s147 = sphi 0, %s146
      %s163 = sphi 0, %s147
    $region4: #{tpu_custom_call.1} parent=1 // loop_header_branch
      %17 = sbr.rel (%p15) target = $region8
    $region5: #{tpu_custom_call.1} parent=1 // loop_body
      %s19 = ssub.s32 %s14, 1
      %s20 = ssub.s32 %s14, 2
      %s27 = sadd.s32 1, %s22
      %p28 = scmp.ge.s32.totalorder %s27, 1
      %s29 = scalar_select %p28, 0, %s27
      %s30 = sadd.s32 1, %s21
      %s31 = scalar_select %p28, %s30, %s21
      %p32 = scmp.ge.s32.totalorder %s31, 2
      %s33 = scalar_select %p32, 0, %s31
      %s34 = ssub.s32 %s21, %s33
      %s35 = ssub.s32 %s22, %s29
      %s36 = sor.u32 %s34, %s35
      %p37 = scmp.eq.s32.totalorder %s36, 0
      %s39 = sadd.s32 %s38, 1
      %s40 = scalar_select %p37, %s38, %s39
      %p43 = pneg %p37
      %p44 = scmp.eq.s32.totalorder %s14, 1
      %p45 = por %p43, %p44
      %p46 = scmp.ne.s32.totalorder %s38, %s41
      %p47 = scmp.eq.s32.totalorder %s14, 0
      %p48 = por %p46, %p47
      %p49 = scmp.ne.s32.totalorder %s38, %s41
      %p50 = scmp.eq.s32.totalorder %s19, 1
      %p51 = por %p49, %p50
      %p52 = scmp.ne.s32.totalorder %s41, %s42
      %p53 = scmp.eq.s32.totalorder %s19, 0
      %p54 = por %p52, %p53
      %p55 = scmp.ne.s32.totalorder %s41, %s42
      %p56 = scmp.eq.s32.totalorder %s20, 1
      %p57 = por %p55, %p56
      %p59 = scmp.ne.s32.totalorder %s42, %s58
      %p60 = scmp.eq.s32.totalorder %s20, 0
      %p61 = por %p59, %p60
      %s62 = ssub.s32 %s21, %s33
      %s63 = ssub.s32 %s22, %s29
      %s64 = sor.u32 %s62, %s63
      %p65 = scmp.eq.s32.totalorder %s64, 0
      %s67 = sadd.s32 %s66, 1
      %s68 = scalar_select %p65, %s66, %s67
      %p71 = pneg %p65
      %p72 = scmp.eq.s32.totalorder %s14, 1
      %p73 = por %p71, %p72
      %p74 = scmp.ne.s32.totalorder %s66, %s69
      %p75 = scmp.eq.s32.totalorder %s14, 0
      %p76 = por %p74, %p75
      %p77 = scmp.ne.s32.totalorder %s66, %s69
      %p78 = scmp.eq.s32.totalorder %s19, 1
      %p79 = por %p77, %p78
      %p80 = scmp.ne.s32.totalorder %s69, %s70
      %p81 = scmp.eq.s32.totalorder %s19, 0
      %p82 = por %p80, %p81
      %p83 = scmp.ne.s32.totalorder %s69, %s70
      %p84 = scmp.eq.s32.totalorder %s20, 1
      %p85 = por %p83, %p84
      %p87 = scmp.ne.s32.totalorder %s70, %s86
      %p88 = scmp.eq.s32.totalorder %s20, 0
      %p89 = por %p87, %p88
      %s91 = sadd.s32 %s90, 1
      %p94 = scmp.eq.s32.totalorder %s14, 1
      %p95 = scmp.ne.s32.totalorder %s90, %s92
      %p96 = scmp.eq.s32.totalorder %s14, 0
      %p97 = por %p95, %p96
      %p98 = scmp.ne.s32.totalorder %s90, %s92
      %p99 = scmp.eq.s32.totalorder %s19, 1
      %p100 = por %p98, %p99
      %p101 = scmp.ne.s32.totalorder %s92, %s93
      %p102 = scmp.eq.s32.totalorder %s19, 0
      %p103 = por %p101, %p102
      %p104 = scmp.ne.s32.totalorder %s92, %s93
      %p105 = scmp.eq.s32.totalorder %s20, 1
      %p106 = por %p104, %p105
      %p108 = scmp.ne.s32.totalorder %s93, %s107
      %p109 = scmp.eq.s32.totalorder %s20, 0
      %p110 = por %p108, %p109
      %s111 = ssub.s32 %s21, %s33
      %s112 = ssub.s32 %s22, %s29
      %s113 = sor.u32 %s111, %s112
      %p114 = scmp.eq.s32.totalorder %s113, 0
      %s116 = sadd.s32 %s115, 1
      %s117 = scalar_select %p114, %s115, %s116
      %p120 = pneg %p114
      %p121 = scmp.eq.s32.totalorder %s14, 1
      %p122 = por %p120, %p121
      %p123 = scmp.ne.s32.totalorder %s115, %s118
      %p124 = scmp.eq.s32.totalorder %s14, 0
      %p125 = por %p123, %p124
      %p126 = scmp.ne.s32.totalorder %s115, %s118
      %p127 = scmp.eq.s32.totalorder %s19, 1
      %p128 = por %p126, %p127
      %p129 = scmp.ne.s32.totalorder %s118, %s119
      %p130 = scmp.eq.s32.totalorder %s19, 0
      %p131 = por %p129, %p130
      %p132 = scmp.ne.s32.totalorder %s118, %s119
      %p133 = scmp.eq.s32.totalorder %s20, 1
      %p134 = por %p132, %p133
      %p136 = scmp.ne.s32.totalorder %s119, %s135
      %p137 = scmp.eq.s32.totalorder %s20, 0
      %p138 = por %p136, %p137
      %s139 = ssub.s32 %s21, %s33
      %s140 = ssub.s32 %s22, %s29
      %s141 = sor.u32 %s139, %s140
      %p142 = scmp.eq.s32.totalorder %s141, 0
      %s144 = sadd.s32 %s143, 1
      %s145 = scalar_select %p142, %s143, %s144
      %p148 = pneg %p142
      %p149 = scmp.eq.s32.totalorder %s14, 1
      %p150 = por %p148, %p149
      %p151 = scmp.ne.s32.totalorder %s143, %s146
      %p152 = scmp.eq.s32.totalorder %s14, 0
      %p153 = por %p151, %p152
      %p154 = scmp.ne.s32.totalorder %s143, %s146
      %p155 = scmp.eq.s32.totalorder %s19, 1
      %p156 = por %p154, %p155
      %p157 = scmp.ne.s32.totalorder %s146, %s147
      %p158 = scmp.eq.s32.totalorder %s19, 0
      %p159 = por %p157, %p158
      %p160 = scmp.ne.s32.totalorder %s146, %s147
      %p161 = scmp.eq.s32.totalorder %s20, 1
      %p162 = por %p160, %p161
      %p164 = scmp.ne.s32.totalorder %s147, %s163
      %p165 = scmp.eq.s32.totalorder %s20, 0
      %p166 = por %p164, %p165
      %p167 = scmp.le.s32.totalorder 1, %s14
      %p168 = scmp.lt.s32.totalorder %s14, 3
      %p169 = pnand %p167, %p168
      %p170 = pneg %p169
      // Predicated region
      $region9: #{tpu_custom_call.1} parent=5 // pred_check
        _
      $region10: #{tpu_custom_call.1} parent=5 // pred_check_branch
        %172 = sbr.rel (%p169) target = $region12
      $region11: #{tpu_custom_call.1} parent=5 // pred_region
        %s173 = ssub.s32 %s14, 1
        // Predicated region
        $region13: #{tpu_custom_call.1} parent=11 // pred_check
          %p174 = pneg %p103
        $region14: #{tpu_custom_call.1} parent=11 // pred_check_branch
          %176 = sbr.rel (%p174) target = $region16
        $region15: #{tpu_custom_call.1} parent=11 // pred_region
          _
        $region16: #{tpu_custom_call.1} parent=11 // pred_fallthru
          _
      $region12: #{tpu_custom_call.1} parent=5 // pred_fallthru
        _
      %p177 = scmp.lt.s32.totalorder %s14, 2
      // Predicated region
      $region17: #{tpu_custom_call.1} parent=5 // pred_check
        %p178 = pneg %p177
      $region18: #{tpu_custom_call.1} parent=5 // pred_check_branch
        %180 = sbr.rel (%p178) target = $region20
      $region19: #{tpu_custom_call.1} parent=5 // pred_region
        // Predicated region
        $region21: #{tpu_custom_call.1} parent=19 // pred_check
          %p181 = pneg %p48
        $region22: #{tpu_custom_call.1} parent=19 // pred_check_branch
          %183 = sbr.rel (%p181) target = $region24
        $region23: #{tpu_custom_call.1} parent=19 // pred_region
          %s184 = sand.u32 %s38, 1
          %s185 = scalar_lea.sflag [#allocation3], %s184
          %s186 = sand.u32 %s38, 1
          %s187 = smul.addr %s186, 8
          %s188 = scalar_lea.vmem [#allocation2], %s187
          %s189 = smul.u32 2, %s22
          %s191 = ssub.s32 128, 128
          %192 = vsyncadd %s185, %s191
          %s193 = smul.addr %s21, 2
          %s194 = sadd.s32 %s189, %s193
          %s195 = smul.addr %s194, 64
          %s196 = scalar_lea.hbm %s0, %s195
          %s198 = sshll.u32 %s188, 4
          %s199 = int_to_ptr.vmem [resolvable:$true] %s198
          %201 = dma.hbm_to_vmem [thread:$0]  %s196, 128, %s199, %s185
        $region24: #{tpu_custom_call.1} parent=19 // pred_fallthru
          _
        // Predicated region
        $region25: #{tpu_custom_call.1} parent=19 // pred_check
          %p202 = pneg %p76
        $region26: #{tpu_custom_call.1} parent=19 // pred_check_branch
          %204 = sbr.rel (%p202) target = $region28
        $region27: #{tpu_custom_call.1} parent=19 // pred_region
          %s205 = smul.u32 2, %s22
          %p206 = scmp.lt.s32.totalorder %s21, 1
          %s207 = scalar_select %p206, %s21, 1
          %p208 = scmp.lt.s32.totalorder %s205, 1
          %s209 = scalar_select %p208, %s205, 1
          %s210 = smul.addr %s207, 2
          %s211 = sadd.s32 %s209, %s210
          %s212 = scalar_lea.vmem %s1, %s211
          %s213 = smul.u32 2, %s22
        $region28: #{tpu_custom_call.1} parent=19 // pred_fallthru
          _
      $region20: #{tpu_custom_call.1} parent=5 // pred_fallthru
        _
      %p214 = scmp.le.s32.totalorder 1, %s14
      %p215 = scmp.lt.s32.totalorder %s14, 3
      %p216 = pnand %p214, %p215
      %p217 = pneg %p216
      // Predicated region
      $region29: #{tpu_custom_call.1} parent=5 // pred_check
        _
      $region30: #{tpu_custom_call.1} parent=5 // pred_check_branch
        %219 = sbr.rel (%p216) target = $region32
      $region31: #{tpu_custom_call.1} parent=5 // pred_region
        %s220 = ssub.s32 %s14, 1
        %s221 = sand.u32 %s41, 1
        %s222 = scalar_lea.sflag [#allocation3], %s221
        %s223 = sand.u32 %s41, 1
        %s224 = smul.addr %s223, 8
        %s225 = scalar_lea.vmem [#allocation2], %s224
        // Predicated region
        $region33: #{tpu_custom_call.1} parent=31 // pred_check
          %p226 = pneg %p54
        $region34: #{tpu_custom_call.1} parent=31 // pred_check_branch
          %228 = sbr.rel (%p226) target = $region36
        $region35: #{tpu_custom_call.1} parent=31 // pred_region
          %229 = dma.done %s222, 128
        $region36: #{tpu_custom_call.1} parent=31 // pred_fallthru
          _
        %s230 = sand.u32 %s41, 1
        %s231 = scalar_lea.sflag [#allocation3], %s230
        %s232 = sand.u32 %s41, 1
        %s233 = smul.addr %s232, 8
        %s234 = scalar_lea.vmem [#allocation2], %s233
        %p235 = pneg %p54
        %p236 = pneg %p51
        %s237 = smul.u32 2, %s24
        %p238 = scmp.lt.s32.totalorder %s23, 1
        %s239 = scalar_select %p238, %s23, 1
        %p240 = scmp.lt.s32.totalorder %s237, 1
        %s241 = scalar_select %p240, %s237, 1
        %s242 = smul.addr %s239, 2
        %s243 = sadd.s32 %s241, %s242
        %s244 = scalar_lea.vmem %s1, %s243
        %p245 = pneg %p82
        %p246 = pneg %p79
        %p247 = pneg %p103
        %p248 = pneg %p100
        %p249 = pneg %p131
        %p250 = pneg %p128
        %p251 = scmp.lt.s32.totalorder %s23, 1
        %s252 = scalar_select %p251, %s23, 1
        %p253 = scmp.lt.s32.totalorder %s24, 0
        %s254 = scalar_select %p253, %s24, 0
        %s255 = sadd.s32 %s254, %s252
        %s256 = scalar_lea.vmem %s3, %s255
        %p257 = pneg %p159
        %p258 = pneg %p156
        %p259 = scmp.lt.s32.totalorder %s23, 1
        %s260 = scalar_select %p259, %s23, 1
        %p261 = scmp.lt.s32.totalorder %s24, 0
        %s262 = scalar_select %p261, %s24, 0
        %s263 = sadd.s32 %s262, %s260
        %s264 = scalar_lea.vmem %s4, %s263
        %s265 = smul.u32 2, %s24
        %s266 = smul.u32 2, %s24
        %p267 = scmp.lt.s32.totalorder %s23, 1
        %s268 = scalar_select %p267, %s23, 1
        %p269 = scmp.lt.s32.totalorder %s266, 1
        %s270 = scalar_select %p269, %s266, 1
        %s271 = smul.addr %s268, 2
        %s272 = sadd.s32 %s270, %s271
        %s273 = scalar_lea.vmem %s1, %s272
        %s274 = smul.u32 2, %s24
        %p275 = scmp.lt.s32.totalorder %s23, 1
        %s276 = scalar_select %p275, %s23, 1
        %p277 = scmp.lt.s32.totalorder %s24, 0
        %s278 = scalar_select %p277, %s24, 0
        %s279 = sadd.s32 %s278, %s276
        %s280 = scalar_lea.vmem %s3, %s279
        %p281 = scmp.lt.s32.totalorder %s23, 1
        %s282 = scalar_select %p281, %s23, 1
        %p283 = scmp.lt.s32.totalorder %s24, 0
        %s284 = scalar_select %p283, %s24, 0
        %s285 = sadd.s32 %s284, %s282
        %s286 = scalar_lea.vmem %s4, %s285
        %v287 = vld [vmem:[%s225] sm:$0xff]
        %v288 = vld [vmem:[%s273] sm:$0x3]
        %v289 = vunpack.c.0.s8 %v288
        %v290 = vld [vmem:[%s2] sm:$0xf]
        %v291 = vlaneseq
        %v292 = vand.u32 %v291, 127
        %v293 = vadd.s32 %v292, 128
        %s294 = smul.u32 %s24, 256
        %v295 = vstv %s294
        %v296 = vadd.s32 %v292, %v295
        %v297 = vadd.s32 %v293, %v295
        %vm298 = vcmp.lt.s32.totalorder %v296, 256
        %vm299 = vcmp.lt.s32.totalorder %v297, 256
        %vm300 = vcmp.ge.s32.totalorder %v289, 0
        %v301 = vsel %vm300, 1, 0
        %v302 = vlaneseq
        %v303 = vshrl.u32 %v302, 7
        %v304 = vsub.s32 0, %v303
        %v305 = vrot.slane %v301, %v304
        %v306 = vlaneseq
        %v307 = vshrl.u32 %v306, 7
        %v308 = vsub.s32 4, %v307
        %v309 = vrot.slane %v301, %v308
        %vm310 = vcmp.ne.s32.totalorder %v305, 0
        %vm311 = vcmp.ne.s32.totalorder %v309, 0
        %vm312 = vmand %vm298, %vm310
        %vm313 = vmand %vm299, %vm311
        %v315 = vcombine.high %v287, %v287
        %vm317 = vcmask 1043456
        %v318 = vsel %vm317, %v287, -inf
        %v319 = vrot.slane %v318, 4
        %v320 = vmax.f32 %v318, %v319
        %v321 = vrot.slane %v320, 2
        %v322 = vmax.f32 %v320, %v321
        %v323 = vrot.slane %v322, 1
        %v324 = vmax.f32 %v322, %v323
        %v325 = vsel %vm317, %v315, -inf
        %v326 = vrot.slane %v325, 4
        %v327 = vmax.f32 %v325, %v326
        %v328 = vrot.slane %v327, 2
        %v329 = vmax.f32 %v327, %v328
        %v330 = vrot.slane %v329, 1
        %v331 = vmax.f32 %v329, %v330
        %v334 = vcombine.low %v324, %v331
        %v336 = vsub.f32 %v287, %v334
        %v337 = vmul.f32 %v336, 1.442695
        %v338 = vpow.pop %v337
        %v340 = vcombine.high %v338, %v338
        %v342 = vsel %vm317, %v338, 0.0
        %v343 = vrot.slane %v342, 4
        %v344 = vadd.f32 %v342, %v343
        %v345 = vrot.slane %v344, 2
        %v346 = vadd.f32 %v344, %v345
        %v347 = vrot.slane %v346, 1
        %v348 = vadd.f32 %v346, %v347
        %v349 = vsel %vm317, %v340, 0.0
        %v350 = vrot.slane %v349, 4
        %v351 = vadd.f32 %v349, %v350
        %v352 = vrot.slane %v351, 2
        %v353 = vadd.f32 %v351, %v352
        %v354 = vrot.slane %v353, 1
        %v355 = vadd.f32 %v353, %v354
        %v356 = vlog2.pop %v348
        %v357 = vmul.f32 %v356, 0.6931472
        %v358 = vlog2.pop %v355
        %v359 = vmul.f32 %v358, 0.6931472
        %v360 = vadd.f32 %v357, %v324
        %v361 = vadd.f32 %v359, %v331
        %v362 = vlaneseq
        %v363 = vshrl.u32 %v362, 7
        %v364 = vlaneseq
        %v365 = vshrl.u32 %v364, 7
        %v366 = vsub.s32 0, %v365
        %v367 = vrot.slane %v289, %v366
        %v368 = vlaneseq
        %v369 = vshrl.u32 %v368, 7
        %v370 = vsub.s32 4, %v369
        %v371 = vrot.slane %v289, %v370
        %v372 = vlaneseq
        %v373 = vshrl.u32 %v372, 7
        %v374 = vsub.s32 0, %v373
        %v375 = vrot.slane %v367, %v374
        %v376 = vlaneseq
        %v377 = vshrl.u32 %v376, 7
        %v378 = vsub.s32 0, %v377
        %v379 = vrot.slane %v371, %v378
        %vm380 = vcmp.eq.s32.totalorder %v363, %v375
        %vm381 = vcmp.eq.s32.totalorder %v363, %v379
        %v382 = vsel %vm380, %v287, 0.0
        %v383 = vsel %vm381, %v315, 0.0
        %v384 = vsel %vm317, %v382, 0.0
        %v385 = vrot.slane %v384, 4
        %v386 = vadd.f32 %v384, %v385
        %v387 = vrot.slane %v386, 2
        %v388 = vadd.f32 %v386, %v387
        %v389 = vrot.slane %v388, 1
        %v390 = vadd.f32 %v388, %v389
        %v391 = vsel %vm317, %v383, 0.0
        %v392 = vrot.slane %v391, 4
        %v393 = vadd.f32 %v391, %v392
        %v394 = vrot.slane %v393, 2
        %v395 = vadd.f32 %v393, %v394
        %v396 = vrot.slane %v395, 1
        %v397 = vadd.f32 %v395, %v396
        %399 = vset.pattern.permute.xlu0 0
        %400 = vperm.xlu0 %399, %v290
        %v401 = vpop.permute.xlu0 %400
        %v403 = vsel %vm380, %v401, 0.0
        %v404 = vsel %vm381, %v401, 0.0
        %v405 = vsel %vm317, %v403, 0.0
        %v406 = vrot.slane %v405, 4
        %v407 = vadd.f32 %v405, %v406
        %v408 = vrot.slane %v407, 2
        %v409 = vadd.f32 %v407, %v408
        %v410 = vrot.slane %v409, 1
        %v411 = vadd.f32 %v409, %v410
        %v412 = vsel %vm317, %v404, 0.0
        %v413 = vrot.slane %v412, 4
        %v414 = vadd.f32 %v412, %v413
        %v415 = vrot.slane %v414, 2
        %v416 = vadd.f32 %v414, %v415
        %v417 = vrot.slane %v416, 1
        %v418 = vadd.f32 %v416, %v417
        %v419 = vsub.f32 %v360, %v390
        %v420 = vsub.f32 %v361, %v397
        %v421 = vmul.f32 %v419, %v411
        %v422 = vmul.f32 %v420, %v418
        %v423 = vsel %vm312, %v421, 0.0
        %v424 = vsel %vm313, %v422, 0.0
        %vm425 = vcmask 1040384
        %v426 = vsel %vm425, %v423, 0.0
        %v427 = vsel %vm425, %v424, 0.0
        %v428 = vadd.f32 %v426, %v427
        %429 = vadd.xlane.f32.xlu0 %v428
        %v430 = vpop.xlane.xlu0 %429
        %v431 = vsel %vm312, %v411, 0.0
        %v432 = vsel %vm313, %v418, 0.0
        %v433 = vsel %vm425, %v431, 0.0
        %v434 = vsel %vm425, %v432, 0.0
        %v435 = vadd.f32 %v433, %v434
        %436 = vadd.xlane.f32.xlu0 %v435
        %v437 = vpop.xlane.xlu0 %436
        %vm438 = vcmask 0
        %439 = vst.msk [vmem:[%s280] sm:$0x1] %vm438, %v430
        %440 = vst.msk [vmem:[%s286] sm:$0x1] %vm438, %v437
        %p441 = scmp.lt.s32.totalorder %s23, 1
        %s442 = scalar_select %p441, %s23, 1
        %p443 = scmp.lt.s32.totalorder %s24, 0
        %s444 = scalar_select %p443, %s24, 0
        %s445 = sadd.s32 %s444, %s442
        %s446 = scalar_lea.vmem %s3, %s445
        %p447 = scmp.lt.s32.totalorder %s23, 1
        %s448 = scalar_select %p447, %s23, 1
        %p449 = scmp.lt.s32.totalorder %s24, 0
        %s450 = scalar_select %p449, %s24, 0
        %s451 = sadd.s32 %s450, %s448
        %s452 = scalar_lea.vmem %s4, %s451
        // Predicated region
        $region37: #{tpu_custom_call.1} parent=31 // pred_check
          %p453 = pneg %p128
        $region38: #{tpu_custom_call.1} parent=31 // pred_check_branch
          %455 = sbr.rel (%p453) target = $region40
        $region39: #{tpu_custom_call.1} parent=31 // pred_region
          _
        $region40: #{tpu_custom_call.1} parent=31 // pred_fallthru
          _
        // Predicated region
        $region41: #{tpu_custom_call.1} parent=31 // pred_check
          %p456 = pneg %p156
        $region42: #{tpu_custom_call.1} parent=31 // pred_check_branch
          %458 = sbr.rel (%p456) target = $region44
        $region43: #{tpu_custom_call.1} parent=31 // pred_region
          _
        $region44: #{tpu_custom_call.1} parent=31 // pred_fallthru
          _
      $region32: #{tpu_custom_call.1} parent=5 // pred_fallthru
        _
      %p459 = scmp.le.s32.totalorder 2, %s14
      // Predicated region
      $region45: #{tpu_custom_call.1} parent=5 // pred_check
        %p460 = pneg %p459
      $region46: #{tpu_custom_call.1} parent=5 // pred_check_branch
        %462 = sbr.rel (%p460) target = $region48
      $region47: #{tpu_custom_call.1} parent=5 // pred_region
        %s463 = ssub.s32 %s14, 2
        // Predicated region
        $region49: #{tpu_custom_call.1} parent=47 // pred_check
          %p464 = pneg %p134
        $region50: #{tpu_custom_call.1} parent=47 // pred_check_branch
          %466 = sbr.rel (%p464) target = $region52
        $region51: #{tpu_custom_call.1} parent=47 // pred_region
          %p467 = scmp.lt.s32.totalorder %s25, 1
          %s468 = scalar_select %p467, %s25, 1
          %p469 = scmp.lt.s32.totalorder %s26, 0
          %s470 = scalar_select %p469, %s26, 0
          %s471 = sadd.s32 %s470, %s468
          %s472 = scalar_lea.vmem %s3, %s471
        $region52: #{tpu_custom_call.1} parent=47 // pred_fallthru
          _
        // Predicated region
        $region53: #{tpu_custom_call.1} parent=47 // pred_check
          %p473 = pneg %p162
        $region54: #{tpu_custom_call.1} parent=47 // pred_check_branch
          %475 = sbr.rel (%p473) target = $region56
        $region55: #{tpu_custom_call.1} parent=47 // pred_region
          %p476 = scmp.lt.s32.totalorder %s25, 1
          %s477 = scalar_select %p476, %s25, 1
          %p478 = scmp.lt.s32.totalorder %s26, 0
          %s479 = scalar_select %p478, %s26, 0
          %s480 = sadd.s32 %s479, %s477
          %s481 = scalar_lea.vmem %s4, %s480
        $region56: #{tpu_custom_call.1} parent=47 // pred_fallthru
          _
      $region48: #{tpu_custom_call.1} parent=5 // pred_fallthru
        _
    $region6: #{tpu_custom_call.1} parent=1 // loop_footer
      %s18 = sadd.s32 1, %s14
    $region7: #{tpu_custom_call.1} parent=1 // loop_footer_branch
      %13 = sbr.rel target = $region3
    $region8: #{tpu_custom_call.1} parent=1 // loop_exit
      _
    %482 = vsyncpa [#allocation3], 1
    %s483 = scalar_lea.sflag [#allocation3], 1
    %484 = vsyncpa %s483, 1

</llo_original>
